<compile_context>
chip_gen: v5e
topology: v5e:2x2
jax: 0.10.0
libtpu: 0.0.40
codegen_flags: <defaults>
</compile_context>

<pallas_src>
import functools

import jax
import jax.numpy as jnp
from jax import lax
from jax.experimental import pallas as pl
from jax.experimental.pallas import tpu as pltpu

# ---- module hyper-parameters (from calculator.py) ---------------------------
N_DIGIT = 2
LEN_PROB = N_DIGIT * 2 + 2            # 6
BLOCK_SIZE = LEN_PROB + N_DIGIT + 1   # 9  (T)
N_EMBD = 32                           # C
HEAD_SIZE = 16                        # head_size (H) chosen for the example


def _head_kernel(x_ref, wq_ref, wk_ref, wv_ref, o_ref, *,
                 batch, seq_pad, head_size):
    """Single grid step over the whole (padded, batch-folded) problem.

    x_ref  : (B*Tp, C) VMEM  -- batch folded into rows, T padded to Tp
    wq_ref : (C, H)    VMEM  -- Wq.T with 1/sqrt(H) pre-folded
    wk_ref : (C, H)    VMEM  -- Wk.T
    wv_ref : (C, H)    VMEM  -- Wv.T
    o_ref  : (B*Tp, H) VMEM  -- lane-contiguous output slab
    """
    Tp, H = seq_pad, head_size

    x = x_ref[...]                                               # (B*Tp, C)

    # Three lane-0-aligned projections over all B*Tp rows at once.
    q_all = jnp.dot(x, wq_ref[...], preferred_element_type=jnp.float32)
    k_all = jnp.dot(x, wk_ref[...], preferred_element_type=jnp.float32)
    v_all = jnp.dot(x, wv_ref[...], preferred_element_type=jnp.float32)

    # Causal mask computed once per kernel invocation (not per batch element).
    # Padded key rows (row index >= real T) follow all real rows, so
    # `col <= row` already excludes them for every real query row.
    row = lax.broadcasted_iota(jnp.int32, (Tp, Tp), 0)
    col = lax.broadcasted_iota(jnp.int32, (Tp, Tp), 1)
    causal = col <= row
    neg = jnp.float32(-1e30)   # large finite value; avoids inf-inf NaN risk

    # B is tiny (2); static unrolled loop of small, sublane-aligned 2-D
    # matmuls (all slices below are static and base is a multiple of 16).
    for b in range(batch):
        base = b * Tp
        q = q_all[base:base + Tp, :]                             # (Tp, H)
        k = k_all[base:base + Tp, :]
        v = v_all[base:base + Tp, :]

        # Scores: contract the head dims directly (scale already folded in Wq).
        wei = lax.dot_general(
            q, k, dimension_numbers=(((1,), (1,)), ((), ())),
            preferred_element_type=jnp.float32)                  # (Tp, Tp)
        wei = jnp.where(causal, wei, neg)

        # Numerically stable softmax with an EXACT normalization.
        m = jnp.max(wei, axis=-1, keepdims=True)
        e = jnp.exp(wei - m)
        denom = jnp.sum(e, axis=-1, keepdims=True)
        p = e / denom                                            # (Tp, Tp)

        # Dropout: eval-mode identity (see TODO above).

        out = jnp.dot(p, v, preferred_element_type=jnp.float32)  # (Tp, H)
        o_ref[base:base + Tp, :] = out.astype(o_ref.dtype)


def head_forward(x, wk, wq, wv):
    """Pallas single-head causal attention.  x: (B, T, C) f32 -> (B, T, H)."""
    B, T, C = x.shape
    H = wk.shape[0]

    # Pad T up to a multiple of 8 (9 -> 16) so per-batch row bases are
    # sublane-aligned inside the kernel; padded query rows are sliced off
    # below and padded key rows are excluded by the causal mask.
    Tp = ((T + 7) // 8) * 8
    x_pad = jnp.pad(x, ((0, 0), (0, Tp - T), (0, 0)))
    x2 = x_pad.reshape(B * Tp, C)

    # Free wrapper-side weight transforms: pre-transpose and fold the
    # 1/sqrt(H) attention scale into the query projection.
    scale = jnp.float32(H) ** -0.5
    wq_t = wq.T * scale                                          # (C, H)
    wk_t = wk.T                                                  # (C, H)
    wv_t = wv.T                                                  # (C, H)

    kernel = functools.partial(
        _head_kernel, batch=B, seq_pad=Tp, head_size=H)
    out2 = pl.pallas_call(
        kernel,
        out_shape=jax.ShapeDtypeStruct((B * Tp, H), x.dtype),
        grid=(1,),
        in_specs=[
            pl.BlockSpec((B * Tp, C), lambda i: (0, 0)),   # all rows at once
            pl.BlockSpec((C, H), lambda i: (0, 0)),        # Wq.T * scale
            pl.BlockSpec((C, H), lambda i: (0, 0)),        # Wk.T
            pl.BlockSpec((C, H), lambda i: (0, 0)),        # Wv.T
        ],
        out_specs=pl.BlockSpec((B * Tp, H), lambda i: (0, 0)),
        compiler_params=pltpu.CompilerParams(
            dimension_semantics=("arbitrary",)),
    )(x2, wq_t, wk_t, wv_t)

    return out2.reshape(B, Tp, H)[:, :T, :]


def _reference(x, wk, wq, wv):
    """Pure-JAX reference matching the PyTorch forward (eval mode)."""
    B, T, C = x.shape
    H = wk.shape[0]
    hp = jax.lax.Precision.HIGHEST
    k = jnp.einsum("btc,hc->bth", x, wk, precision=hp)
    q = jnp.einsum("btc,hc->bth", x, wq, precision=hp)
    v = jnp.einsum("btc,hc->bth", x, wv, precision=hp)
    wei = jnp.einsum("bth,bsh->bts", q, k, precision=hp) * (H ** -0.5)
    tril = jnp.tril(jnp.ones((T, T)))
    wei = jnp.where(tril == 0, -jnp.inf, wei)
    wei = jax.nn.softmax(wei, axis=-1)
    return jnp.einsum("bts,bsh->bth", wei, v, precision=hp)


if __name__ == "__main__":
    key = jax.random.PRNGKey(0)
    k_x, k_k, k_q, k_v = jax.random.split(key, 4)

    B, T, C, H = 2, BLOCK_SIZE, N_EMBD, HEAD_SIZE

    # deterministic inputs
    x = jax.random.normal(k_x, (B, T, C), dtype=jnp.float32)

    # nn.Linear(n_embd, head_size, bias=False) default init:
    # uniform(-1/sqrt(in_features), 1/sqrt(in_features)), shape (out, in)
    bound = 1.0 / (C ** 0.5)
    wk = jax.random.uniform(k_k, (H, C), jnp.float32, -bound, bound)
    wq = jax.random.uniform(k_q, (H, C), jnp.float32, -bound, bound)
    wv = jax.random.uniform(k_v, (H, C), jnp.float32, -bound, bound)

    out = head_forward(x, wk, wq, wv)
    out = jax.block_until_ready(out)

    ref = _reference(x, wk, wq, wv)
    assert out.shape == (B, T, H), out.shape
    err = float(jnp.max(jnp.abs(out - ref)))
    assert jnp.allclose(out, ref, atol=5e-4, rtol=5e-4), err

    print("KERNEL_OK")
</pallas_src>

<mosaic_0001>
module attributes {stable_mosaic.version = 11 : i64} {
  func.func @_head_kernel(%arg0: i32, %arg1: memref<32x32xf32, #tpu.memory_space<vmem>>, %arg2: memref<32x16xf32, #tpu.memory_space<vmem>>, %arg3: memref<32x16xf32, #tpu.memory_space<vmem>>, %arg4: memref<32x16xf32, #tpu.memory_space<vmem>>, %arg5: memref<32x16xf32, #tpu.memory_space<vmem>>) attributes {dimension_semantics = [#tpu.dimension_semantics<arbitrary>], iteration_bounds = array<i64: 1>, scalar_prefetch = 0 : i64, scratch_operands = 0 : i64, tpu.core_type = #tpu.core_type<tc>, window_params = [{pipeline_mode = #tpu.pipeline_mode<synchronous>, transform_indices = @transform_0, window_bounds = array<i64: 32, 32>}, {pipeline_mode = #tpu.pipeline_mode<synchronous>, transform_indices = @transform_1, window_bounds = array<i64: 32, 16>}, {pipeline_mode = #tpu.pipeline_mode<synchronous>, transform_indices = @transform_2, window_bounds = array<i64: 32, 16>}, {pipeline_mode = #tpu.pipeline_mode<synchronous>, transform_indices = @transform_3, window_bounds = array<i64: 32, 16>}, {pipeline_mode = #tpu.pipeline_mode<synchronous>, transform_indices = @transform_4, window_bounds = array<i64: 32, 16>}]} {
    %c0 = arith.constant 0 : index
    %c0_0 = arith.constant 0 : index
    %0 = vector.load %arg1[%c0, %c0_0] : memref<32x32xf32, #tpu.memory_space<vmem>>, vector<32x32xf32>
    %c0_1 = arith.constant 0 : index
    %c0_2 = arith.constant 0 : index
    %1 = vector.load %arg2[%c0_1, %c0_2] : memref<32x16xf32, #tpu.memory_space<vmem>>, vector<32x16xf32>
    %cst = arith.constant dense<0.000000e+00> : vector<32x16xf32>
    %2 = tpu.matmul %0, %1, %cst {dimension_numbers = #tpu.dot_dimension_numbers<[1], [0], [0], [1], [0, 0, 1, 1], [], []>} : vector<32x32xf32>, vector<32x16xf32>, vector<32x16xf32> -> vector<32x16xf32>
    %c0_3 = arith.constant 0 : index
    %c0_4 = arith.constant 0 : index
    %3 = vector.load %arg3[%c0_3, %c0_4] : memref<32x16xf32, #tpu.memory_space<vmem>>, vector<32x16xf32>
    %cst_5 = arith.constant dense<0.000000e+00> : vector<32x16xf32>
    %4 = tpu.matmul %0, %3, %cst_5 {dimension_numbers = #tpu.dot_dimension_numbers<[1], [0], [0], [1], [0, 0, 1, 1], [], []>} : vector<32x32xf32>, vector<32x16xf32>, vector<32x16xf32> -> vector<32x16xf32>
    %c0_6 = arith.constant 0 : index
    %c0_7 = arith.constant 0 : index
    %5 = vector.load %arg4[%c0_6, %c0_7] : memref<32x16xf32, #tpu.memory_space<vmem>>, vector<32x16xf32>
    %cst_8 = arith.constant dense<0.000000e+00> : vector<32x16xf32>
    %6 = tpu.matmul %0, %5, %cst_8 {dimension_numbers = #tpu.dot_dimension_numbers<[1], [0], [0], [1], [0, 0, 1, 1], [], []>} : vector<32x32xf32>, vector<32x16xf32>, vector<32x16xf32> -> vector<32x16xf32>
    %7 = tpu.iota {dimensions = array<i32: 0>} : vector<16x16xi32>
    %8 = tpu.iota {dimensions = array<i32: 1>} : vector<16x16xi32>
    %9 = arith.cmpi sle, %8, %7 : vector<16x16xi32>
    %10 = vector.extract_strided_slice %2 {offsets = [0, 0], sizes = [16, 16], strides = [1, 1]} : vector<32x16xf32> to vector<16x16xf32>
    %11 = vector.extract_strided_slice %4 {offsets = [0, 0], sizes = [16, 16], strides = [1, 1]} : vector<32x16xf32> to vector<16x16xf32>
    %12 = vector.extract_strided_slice %6 {offsets = [0, 0], sizes = [16, 16], strides = [1, 1]} : vector<32x16xf32> to vector<16x16xf32>
    %cst_9 = arith.constant dense<0.000000e+00> : vector<16x16xf32>
    %13 = tpu.matmul %10, %11, %cst_9 {dimension_numbers = #tpu.dot_dimension_numbers<[1], [1], [0], [0], [0, 0, 1, 0], [], []>} : vector<16x16xf32>, vector<16x16xf32>, vector<16x16xf32> -> vector<16x16xf32>
    %cst_10 = arith.constant -1.000000e+30 : f32
    %14 = vector.broadcast %cst_10 : f32 to vector<16x16xf32>
    %15 = arith.select %9, %13, %14 : vector<16x16xi1>, vector<16x16xf32>
    %cst_11 = arith.constant dense<0xFF800000> : vector<16xf32>
    %16 = vector.multi_reduction <maximumf>, %15, %cst_11 [1] : vector<16x16xf32> to vector<16xf32>
    %17 = vector.shape_cast %16 : vector<16xf32> to vector<16x1xf32>
    %18 = vector.broadcast %17 : vector<16x1xf32> to vector<16x16xf32>
    %19 = arith.subf %15, %18 : vector<16x16xf32>
    %20 = math.exp %19 : vector<16x16xf32>
    %cst_12 = arith.constant dense<0.000000e+00> : vector<16xf32>
    %21 = vector.multi_reduction <add>, %20, %cst_12 [1] : vector<16x16xf32> to vector<16xf32>
    %22 = vector.shape_cast %21 : vector<16xf32> to vector<16x1xf32>
    %23 = vector.broadcast %22 : vector<16x1xf32> to vector<16x16xf32>
    %24 = arith.divf %20, %23 : vector<16x16xf32>
    %cst_13 = arith.constant dense<0.000000e+00> : vector<16x16xf32>
    %25 = tpu.matmul %24, %12, %cst_13 {dimension_numbers = #tpu.dot_dimension_numbers<[1], [0], [0], [1], [0, 0, 1, 1], [], []>} : vector<16x16xf32>, vector<16x16xf32>, vector<16x16xf32> -> vector<16x16xf32>
    %c0_14 = arith.constant 0 : index
    %c0_15 = arith.constant 0 : index
    %26 = vector.load %arg5[%c0_14, %c0_15] : memref<32x16xf32, #tpu.memory_space<vmem>>, vector<16x16xf32>
    tpu.vector_store %arg5[%c0_14, %c0_15], %25 {strides = array<i32>} : memref<32x16xf32, #tpu.memory_space<vmem>>, vector<16x16xf32>,
    %27 = vector.extract_strided_slice %2 {offsets = [16, 0], sizes = [16, 16], strides = [1, 1]} : vector<32x16xf32> to vector<16x16xf32>
    %28 = vector.extract_strided_slice %4 {offsets = [16, 0], sizes = [16, 16], strides = [1, 1]} : vector<32x16xf32> to vector<16x16xf32>
    %29 = vector.extract_strided_slice %6 {offsets = [16, 0], sizes = [16, 16], strides = [1, 1]} : vector<32x16xf32> to vector<16x16xf32>
    %cst_16 = arith.constant dense<0.000000e+00> : vector<16x16xf32>
    %30 = tpu.matmul %27, %28, %cst_16 {dimension_numbers = #tpu.dot_dimension_numbers<[1], [1], [0], [0], [0, 0, 1, 0], [], []>} : vector<16x16xf32>, vector<16x16xf32>, vector<16x16xf32> -> vector<16x16xf32>
    %cst_17 = arith.constant -1.000000e+30 : f32
    %31 = vector.broadcast %cst_17 : f32 to vector<16x16xf32>
    %32 = arith.select %9, %30, %31 : vector<16x16xi1>, vector<16x16xf32>
    %cst_18 = arith.constant dense<0xFF800000> : vector<16xf32>
    %33 = vector.multi_reduction <maximumf>, %32, %cst_18 [1] : vector<16x16xf32> to vector<16xf32>
    %34 = vector.shape_cast %33 : vector<16xf32> to vector<16x1xf32>
    %35 = vector.broadcast %34 : vector<16x1xf32> to vector<16x16xf32>
    %36 = arith.subf %32, %35 : vector<16x16xf32>
    %37 = math.exp %36 : vector<16x16xf32>
    %cst_19 = arith.constant dense<0.000000e+00> : vector<16xf32>
    %38 = vector.multi_reduction <add>, %37, %cst_19 [1] : vector<16x16xf32> to vector<16xf32>
    %39 = vector.shape_cast %38 : vector<16xf32> to vector<16x1xf32>
    %40 = vector.broadcast %39 : vector<16x1xf32> to vector<16x16xf32>
    %41 = arith.divf %37, %40 : vector<16x16xf32>
    %cst_20 = arith.constant dense<0.000000e+00> : vector<16x16xf32>
    %42 = tpu.matmul %41, %29, %cst_20 {dimension_numbers = #tpu.dot_dimension_numbers<[1], [0], [0], [1], [0, 0, 1, 1], [], []>} : vector<16x16xf32>, vector<16x16xf32>, vector<16x16xf32> -> vector<16x16xf32>
    %c16 = arith.constant 16 : index
    %c0_21 = arith.constant 0 : index
    %43 = vector.load %arg5[%c16, %c0_21] : memref<32x16xf32, #tpu.memory_space<vmem>>, vector<16x16xf32>
    tpu.vector_store %arg5[%c16, %c0_21], %42 {strides = array<i32>} : memref<32x16xf32, #tpu.memory_space<vmem>>, vector<16x16xf32>,
    return
  }
  func.func @transform_0(%arg0: i32) -> (i32, i32) {
    %c0_i32 = arith.constant 0 : i32
    %c0_i32_0 = arith.constant 0 : i32
    %c0_i32_1 = arith.constant 0 : i32
    return %c0_i32, %c0_i32_0 : i32, i32
  }
  func.func @transform_1(%arg0: i32) -> (i32, i32) {
    %c0_i32 = arith.constant 0 : i32
    %c0_i32_0 = arith.constant 0 : i32
    %c0_i32_1 = arith.constant 0 : i32
    return %c0_i32, %c0_i32_0 : i32, i32
  }
  func.func @transform_2(%arg0: i32) -> (i32, i32) {
    %c0_i32 = arith.constant 0 : i32
    %c0_i32_0 = arith.constant 0 : i32
    %c0_i32_1 = arith.constant 0 : i32
    return %c0_i32, %c0_i32_0 : i32, i32
  }
  func.func @transform_3(%arg0: i32) -> (i32, i32) {
    %c0_i32 = arith.constant 0 : i32
    %c0_i32_0 = arith.constant 0 : i32
    %c0_i32_1 = arith.constant 0 : i32
    return %c0_i32, %c0_i32_0 : i32, i32
  }
  func.func @transform_4(%arg0: i32) -> (i32, i32) {
    %c0_i32 = arith.constant 0 : i32
    %c0_i32_0 = arith.constant 0 : i32
    %c0_i32_1 = arith.constant 0 : i32
    return %c0_i32, %c0_i32_0 : i32, i32
  }
}

</mosaic_0001>

<llo_original>
// kernel: tpu_custom_call.1
$region0: #{tpu_custom_call.1}
  #allocation0 [shape = 'u32[]', space=smem, size = 0x4, offset = 0x4, fixed_abs, tag = 'smem constant byte address 0x4 - core index']
  #allocation1 [shape = 'u32[72,128]{1,0:T(1,128)}', space=vmem, size = 0x9000, scoped, tag = 'internal scratch']
  %s0 = inlined_call_operand.vmem [shape: f32[32,32], index: 0, kind: input, shape index: {}]
  %s1 = inlined_call_operand.vmem [shape: f32[32,16], index: 1, kind: input, shape index: {}]
  %s2 = inlined_call_operand.vmem [shape: f32[32,16], index: 2, kind: input, shape index: {}]
  %s3 = inlined_call_operand.vmem [shape: f32[32,16], index: 3, kind: input, shape index: {}]
  %s4 = inlined_call_operand.vmem [shape: f32[32,16], index: 4, kind: output, shape index: {}]
  %s5 = sld [smem:[#allocation0]]
  $region26: #{tpu_custom_call.1} parent=0
    _
  %s7 = ssub.s32 1, %s5
  %s8 = scalar_select 0, %s7, %s5
  // Predicated region
  $region2: #{tpu_custom_call.1} parent=0 // pred_check
    _
  $region3: #{tpu_custom_call.1} parent=0 // pred_check_branch
    %10 = sbr.rel (0) target = $region5
  $region4: #{tpu_custom_call.1} parent=0 // pred_region
    _
  $region5: #{tpu_custom_call.1} parent=0 // pred_fallthru
    _
  // Predicated region
  $region6: #{tpu_custom_call.1} parent=0 // pred_check
    _
  $region7: #{tpu_custom_call.1} parent=0 // pred_check_branch
    %12 = sbr.rel (0) target = $region9
  $region8: #{tpu_custom_call.1} parent=0 // pred_region
    _
  $region9: #{tpu_custom_call.1} parent=0 // pred_fallthru
    _
  // Predicated region
  $region10: #{tpu_custom_call.1} parent=0 // pred_check
    _
  $region11: #{tpu_custom_call.1} parent=0 // pred_check_branch
    %14 = sbr.rel (0) target = $region13
  $region12: #{tpu_custom_call.1} parent=0 // pred_region
    _
  $region13: #{tpu_custom_call.1} parent=0 // pred_fallthru
    _
  // Predicated region
  $region14: #{tpu_custom_call.1} parent=0 // pred_check
    _
  $region15: #{tpu_custom_call.1} parent=0 // pred_check_branch
    %16 = sbr.rel (0) target = $region17
  $region16: #{tpu_custom_call.1} parent=0 // pred_region
    _
  $region17: #{tpu_custom_call.1} parent=0 // pred_fallthru
    _
  %v17 = vld [vmem:[%s0] sm:$0xff]
  %v18 = vld [vmem:[%s0 + $0x8] sm:$0xff]
  %v19 = vld [vmem:[%s0 + $0x10] sm:$0xff]
  %v20 = vld [vmem:[%s0 + $0x18] sm:$0xff]
  %v21 = vld [vmem:[%s1] sm:$0xff]
  %v22 = vld [vmem:[%s1 + $0x8] sm:$0xff]
  %v23 = vld [vmem:[%s1 + $0x10] sm:$0xff]
  %v24 = vld [vmem:[%s1 + $0x18] sm:$0xff]
  %vm25 = vcmask 261120
  %v27 = vsel %vm25, %v17, 0
  %v30 = vsel %vm25, %v18, 0
  %v33 = vsel %vm25, %v19, 0
  %v36 = vsel %vm25, %v20, 0
  %38 = vmatpush.msra.mxu0 0.0
  %39 = vmatpush.msra.mxu0 0.0
  %40 = vmatpush.msra.mxu0 0.0
  %41 = vmatpush.msra.mxu0 0.0
  %42 = vmatpush.msra.mxu0 0.0
  %43 = vmatpush.msra.mxu0 0.0
  %44 = vmatpush.msra.mxu0 0.0
  %45 = vmatpush.msra.mxu0 0.0
  %46 = vmatpush.msra.mxu0 0.0
  %47 = vmatpush.msra.mxu0 0.0
  %48 = vmatpush.msra.mxu0 0.0
  %49 = vmatpush.msra.mxu0 0.0
  %50 = vmatpush.msra.mxu0 %v24
  %51 = vmatpush.msra.mxu0 %v23
  %52 = vmatpush.msra.mxu0 %v22
  %53 = vmatpush.msra.mxu0 %v21
  %54 = vmatmul.f32.gmra.mxu0 %v27
  %v55 = vpop.f32.mrf.mxu0
  %v56 = vadd.f32 0.0, %v55
  %57 = vmatmul.f32.gmra.mxu0 %v30
  %v58 = vpop.f32.mrf.mxu0
  %v59 = vadd.f32 0.0, %v58
  %60 = vmatmul.f32.gmra.mxu0 %v33
  %v61 = vpop.f32.mrf.mxu0
  %v62 = vadd.f32 0.0, %v61
  %63 = vmatmul.f32.gmra.mxu0 %v36
  %v64 = vpop.f32.mrf.mxu0
  %v65 = vadd.f32 0.0, %v64
  %66 = vdwg.mxu0
  %v67 = vld [vmem:[%s2] sm:$0xff]
  %v68 = vld [vmem:[%s2 + $0x8] sm:$0xff]
  %v69 = vld [vmem:[%s2 + $0x10] sm:$0xff]
  %v70 = vld [vmem:[%s2 + $0x18] sm:$0xff]
  %71 = vmatpush.msra.mxu0 0.0
  %72 = vmatpush.msra.mxu0 0.0
  %73 = vmatpush.msra.mxu0 0.0
  %74 = vmatpush.msra.mxu0 0.0
  %75 = vmatpush.msra.mxu0 0.0
  %76 = vmatpush.msra.mxu0 0.0
  %77 = vmatpush.msra.mxu0 0.0
  %78 = vmatpush.msra.mxu0 0.0
  %79 = vmatpush.msra.mxu0 0.0
  %80 = vmatpush.msra.mxu0 0.0
  %81 = vmatpush.msra.mxu0 0.0
  %82 = vmatpush.msra.mxu0 0.0
  %83 = vmatpush.msra.mxu0 %v70
  %84 = vmatpush.msra.mxu0 %v69
  %85 = vmatpush.msra.mxu0 %v68
  %86 = vmatpush.msra.mxu0 %v67
  %87 = vmatmul.f32.gmra.mxu0 %v27
  %v88 = vpop.f32.mrf.mxu0
  %v89 = vadd.f32 0.0, %v88
  %90 = vmatmul.f32.gmra.mxu0 %v30
  %v91 = vpop.f32.mrf.mxu0
  %v92 = vadd.f32 0.0, %v91
  %93 = vmatmul.f32.gmra.mxu0 %v33
  %v94 = vpop.f32.mrf.mxu0
  %v95 = vadd.f32 0.0, %v94
  %96 = vmatmul.f32.gmra.mxu0 %v36
  %v97 = vpop.f32.mrf.mxu0
  %v98 = vadd.f32 0.0, %v97
  %99 = vdwg.mxu0
  %v100 = vld [vmem:[%s3] sm:$0xff]
  %v101 = vld [vmem:[%s3 + $0x8] sm:$0xff]
  %v102 = vld [vmem:[%s3 + $0x10] sm:$0xff]
  %v103 = vld [vmem:[%s3 + $0x18] sm:$0xff]
  %104 = vmatpush.msra.mxu0 0.0
  %105 = vmatpush.msra.mxu0 0.0
  %106 = vmatpush.msra.mxu0 0.0
  %107 = vmatpush.msra.mxu0 0.0
  %108 = vmatpush.msra.mxu0 0.0
  %109 = vmatpush.msra.mxu0 0.0
  %110 = vmatpush.msra.mxu0 0.0
  %111 = vmatpush.msra.mxu0 0.0
  %112 = vmatpush.msra.mxu0 0.0
  %113 = vmatpush.msra.mxu0 0.0
  %114 = vmatpush.msra.mxu0 0.0
  %115 = vmatpush.msra.mxu0 0.0
  %116 = vmatpush.msra.mxu0 %v103
  %117 = vmatpush.msra.mxu0 %v102
  %118 = vmatpush.msra.mxu0 %v101
  %119 = vmatpush.msra.mxu0 %v100
  %120 = vmatmul.f32.gmra.mxu0 %v27
  %v121 = vpop.f32.mrf.mxu0
  %v122 = vadd.f32 0.0, %v121
  %123 = vmatmul.f32.gmra.mxu0 %v30
  %v124 = vpop.f32.mrf.mxu0
  %v125 = vadd.f32 0.0, %v124
  %126 = vmatmul.f32.gmra.mxu0 %v33
  %v127 = vpop.f32.mrf.mxu0
  %v128 = vadd.f32 0.0, %v127
  %129 = vmatmul.f32.gmra.mxu0 %v36
  %v130 = vpop.f32.mrf.mxu0
  %v131 = vadd.f32 0.0, %v130
  %132 = vdwg.mxu0
  %v133 = vlaneseq
  %v134 = vshrl.u32 %v133, 7
  %v135 = vadd.s32 %v134, 8
  %v136 = vlaneseq
  %v137 = vand.u32 %v136, 127
  %vm138 = vcmp.le.s32.totalorder %v137, %v134
  %vm139 = vcmp.le.s32.totalorder %v137, %v135
  %vm140 = vcmask 130048
  %v142 = vsel %vm140, %v56, 0
  %v145 = vsel %vm140, %v59, 0
  %v148 = vsel %vm140, %v89, 0
  %v151 = vsel %vm140, %v92, 0
  %153 = vmatpush.xpose.msra.mxu0 0.0
  %154 = vmatpush.xpose.msra.mxu0 0.0
  %155 = vmatpush.xpose.msra.mxu0 0.0
  %156 = vmatpush.xpose.msra.mxu0 0.0
  %157 = vmatpush.xpose.msra.mxu0 0.0
  %158 = vmatpush.xpose.msra.mxu0 0.0
  %159 = vmatpush.xpose.msra.mxu0 0.0
  %160 = vmatpush.xpose.msra.mxu0 0.0
  %161 = vmatpush.xpose.msra.mxu0 0.0
  %162 = vmatpush.xpose.msra.mxu0 0.0
  %163 = vmatpush.xpose.msra.mxu0 0.0
  %164 = vmatpush.xpose.msra.mxu0 0.0
  %165 = vmatpush.xpose.msra.mxu0 0.0
  %166 = vmatpush.xpose.msra.mxu0 0.0
  %167 = vmatpush.xpose.msra.mxu0 %v151
  %168 = vmatpush.xpose.msra.mxu0 %v148
  %169 = vmatmul.f32.gmra.mxu0 %v142
  %v170 = vpop.f32.mrf.mxu0
  %v171 = vadd.f32 0.0, %v170
  %172 = vmatmul.f32.gmra.mxu0 %v145
  %v173 = vpop.f32.mrf.mxu0
  %v174 = vadd.f32 0.0, %v173
  %175 = vdwg.mxu0
  %v176 = vsel %vm138, %v171, -1e+30
  %v177 = vsel %vm139, %v174, -1e+30
  %v178 = vsel %vm140, %v176, -inf
  %179 = vmax.xlane.f32.xlu0 %v178
  %v180 = vpop.xlane.xlu0 %179
  %v181 = vsel %vm140, %v177, -inf
  %182 = vmax.xlane.f32.xlu0 %v181
  %v183 = vpop.xlane.xlu0 %182
  %v184 = vsub.f32 %v176, %v180
  %v185 = vsub.f32 %v177, %v183
  %v186 = vmul.f32 %v184, 1.442695
  %v187 = vpow.pop %v186
  %v188 = vmul.f32 %v185, 1.442695
  %v189 = vpow.pop %v188
  %v190 = vsel %vm140, %v187, 0.0
  %191 = vadd.xlane.f32.xlu0 %v190
  %v192 = vpop.xlane.xlu0 %191
  %v193 = vsel %vm140, %v189, 0.0
  %194 = vadd.xlane.f32.xlu0 %v193
  %v195 = vpop.xlane.xlu0 %194
  %v196 = vrcp.pop %v192
  %v197 = vmul.f32 %v192, %v196
  %v198 = vsub.f32 1.0, %v197
  %v199 = vmul.f32 %v196, %v198
  %v200 = vadd.f32 %v196, %v199
  %vm201 = vweird.f32 %v192
  %vm202 = vweird.f32 %v196
  %vm203 = vmor %vm201, %vm202
  %v204 = vsel %vm203, %v196, %v200
  %v205 = vand.u32 2147483647, %v192
  %vm206 = vcmp.eq.f32.partialorder %v205, 8.507059e+37
  %v207 = vand.u32 %v192, 2147483648
  %v208 = vor.u32 1.1754944e-38, %v207
  %v209 = vsel %vm206, %v208, %v204
  %v210 = vmul.f32 %v187, %v209
  %v211 = vrcp.pop %v195
  %v212 = vmul.f32 %v195, %v211
  %v213 = vsub.f32 1.0, %v212
  %v214 = vmul.f32 %v211, %v213
  %v215 = vadd.f32 %v211, %v214
  %vm216 = vweird.f32 %v195
  %vm217 = vweird.f32 %v211
  %vm218 = vmor %vm216, %vm217
  %v219 = vsel %vm218, %v211, %v215
  %v220 = vand.u32 2147483647, %v195
  %vm221 = vcmp.eq.f32.partialorder %v220, 8.507059e+37
  %v222 = vand.u32 %v195, 2147483648
  %v223 = vor.u32 1.1754944e-38, %v222
  %v224 = vsel %vm221, %v223, %v219
  %v225 = vmul.f32 %v189, %v224
  %v227 = vsel %vm140, %v210, 0
  %v230 = vsel %vm140, %v225, 0
  %232 = vmatpush.msra.mxu0 0.0
  %233 = vmatpush.msra.mxu0 0.0
  %234 = vmatpush.msra.mxu0 0.0
  %235 = vmatpush.msra.mxu0 0.0
  %236 = vmatpush.msra.mxu0 0.0
  %237 = vmatpush.msra.mxu0 0.0
  %238 = vmatpush.msra.mxu0 0.0
  %239 = vmatpush.msra.mxu0 0.0
  %240 = vmatpush.msra.mxu0 0.0
  %241 = vmatpush.msra.mxu0 0.0
  %242 = vmatpush.msra.mxu0 0.0
  %243 = vmatpush.msra.mxu0 0.0
  %244 = vmatpush.msra.mxu0 0.0
  %245 = vmatpush.msra.mxu0 0.0
  %246 = vmatpush.msra.mxu0 %v125
  %247 = vmatpush.msra.mxu0 %v122
  %248 = vmatmul.f32.gmra.mxu0 %v227
  %v249 = vpop.f32.mrf.mxu0
  %v250 = vadd.f32 0.0, %v249
  %251 = vmatmul.f32.gmra.mxu0 %v230
  %v252 = vpop.f32.mrf.mxu0
  %v253 = vadd.f32 0.0, %v252
  %254 = vdwg.mxu0
  %255 = vst.msk [vmem:[%s4] sm:$0xff] %vm140, %v250
  %256 = vst.msk [vmem:[%s4 + $0x8] sm:$0xff] %vm140, %v253
  %v258 = vsel %vm140, %v62, 0
  %v261 = vsel %vm140, %v65, 0
  %v264 = vsel %vm140, %v95, 0
  %v267 = vsel %vm140, %v98, 0
  %269 = vmatpush.xpose.msra.mxu0 0.0
  %270 = vmatpush.xpose.msra.mxu0 0.0
  %271 = vmatpush.xpose.msra.mxu0 0.0
  %272 = vmatpush.xpose.msra.mxu0 0.0
  %273 = vmatpush.xpose.msra.mxu0 0.0
  %274 = vmatpush.xpose.msra.mxu0 0.0
  %275 = vmatpush.xpose.msra.mxu0 0.0
  %276 = vmatpush.xpose.msra.mxu0 0.0
  %277 = vmatpush.xpose.msra.mxu0 0.0
  %278 = vmatpush.xpose.msra.mxu0 0.0
  %279 = vmatpush.xpose.msra.mxu0 0.0
  %280 = vmatpush.xpose.msra.mxu0 0.0
  %281 = vmatpush.xpose.msra.mxu0 0.0
  %282 = vmatpush.xpose.msra.mxu0 0.0
  %283 = vmatpush.xpose.msra.mxu0 %v267
  %284 = vmatpush.xpose.msra.mxu0 %v264
  %285 = vmatmul.f32.gmra.mxu0 %v258
  %v286 = vpop.f32.mrf.mxu0
  %v287 = vadd.f32 0.0, %v286
  %288 = vmatmul.f32.gmra.mxu0 %v261
  %v289 = vpop.f32.mrf.mxu0
  %v290 = vadd.f32 0.0, %v289
  %291 = vdwg.mxu0
  %v292 = vsel %vm138, %v287, -1e+30
  %v293 = vsel %vm139, %v290, -1e+30
  %v294 = vsel %vm140, %v292, -inf
  %295 = vmax.xlane.f32.xlu0 %v294
  %v296 = vpop.xlane.xlu0 %295
  %v297 = vsel %vm140, %v293, -inf
  %298 = vmax.xlane.f32.xlu0 %v297
  %v299 = vpop.xlane.xlu0 %298
  %v300 = vsub.f32 %v292, %v296
  %v301 = vsub.f32 %v293, %v299
  %v302 = vmul.f32 %v300, 1.442695
  %v303 = vpow.pop %v302
  %v304 = vmul.f32 %v301, 1.442695
  %v305 = vpow.pop %v304
  %v306 = vsel %vm140, %v303, 0.0
  %307 = vadd.xlane.f32.xlu0 %v306
  %v308 = vpop.xlane.xlu0 %307
  %v309 = vsel %vm140, %v305, 0.0
  %310 = vadd.xlane.f32.xlu0 %v309
  %v311 = vpop.xlane.xlu0 %310
  %v312 = vrcp.pop %v308
  %v313 = vmul.f32 %v308, %v312
  %v314 = vsub.f32 1.0, %v313
  %v315 = vmul.f32 %v312, %v314
  %v316 = vadd.f32 %v312, %v315
  %vm317 = vweird.f32 %v308
  %vm318 = vweird.f32 %v312
  %vm319 = vmor %vm317, %vm318
  %v320 = vsel %vm319, %v312, %v316
  %v321 = vand.u32 2147483647, %v308
  %vm322 = vcmp.eq.f32.partialorder %v321, 8.507059e+37
  %v323 = vand.u32 %v308, 2147483648
  %v324 = vor.u32 1.1754944e-38, %v323
  %v325 = vsel %vm322, %v324, %v320
  %v326 = vmul.f32 %v303, %v325
  %v327 = vrcp.pop %v311
  %v328 = vmul.f32 %v311, %v327
  %v329 = vsub.f32 1.0, %v328
  %v330 = vmul.f32 %v327, %v329
  %v331 = vadd.f32 %v327, %v330
  %vm332 = vweird.f32 %v311
  %vm333 = vweird.f32 %v327
  %vm334 = vmor %vm332, %vm333
  %v335 = vsel %vm334, %v327, %v331
  %v336 = vand.u32 2147483647, %v311
  %vm337 = vcmp.eq.f32.partialorder %v336, 8.507059e+37
  %v338 = vand.u32 %v311, 2147483648
  %v339 = vor.u32 1.1754944e-38, %v338
  %v340 = vsel %vm337, %v339, %v335
  %v341 = vmul.f32 %v305, %v340
  %v343 = vsel %vm140, %v326, 0
  %v346 = vsel %vm140, %v341, 0
  %348 = vmatpush.msra.mxu0 0.0
  %349 = vmatpush.msra.mxu0 0.0
  %350 = vmatpush.msra.mxu0 0.0
  %351 = vmatpush.msra.mxu0 0.0
  %352 = vmatpush.msra.mxu0 0.0
  %353 = vmatpush.msra.mxu0 0.0
  %354 = vmatpush.msra.mxu0 0.0
  %355 = vmatpush.msra.mxu0 0.0
  %356 = vmatpush.msra.mxu0 0.0
  %357 = vmatpush.msra.mxu0 0.0
  %358 = vmatpush.msra.mxu0 0.0
  %359 = vmatpush.msra.mxu0 0.0
  %360 = vmatpush.msra.mxu0 0.0
  %361 = vmatpush.msra.mxu0 0.0
  %362 = vmatpush.msra.mxu0 %v131
  %363 = vmatpush.msra.mxu0 %v128
  %364 = vmatmul.f32.gmra.mxu0 %v343
  %v365 = vpop.f32.mrf.mxu0
  %v366 = vadd.f32 0.0, %v365
  %367 = vmatmul.f32.gmra.mxu0 %v346
  %v368 = vpop.f32.mrf.mxu0
  %v369 = vadd.f32 0.0, %v368
  %370 = vdwg.mxu0
  %371 = vst.msk [vmem:[%s4 + $0x10] sm:$0xff] %vm140, %v366
  %372 = vst.msk [vmem:[%s4 + $0x18] sm:$0xff] %vm140, %v369
  // Predicated region
  $region18: #{tpu_custom_call.1} parent=0 // pred_check
    _
  $region19: #{tpu_custom_call.1} parent=0 // pred_check_branch
    %374 = sbr.rel (0) target = $region21
  $region20: #{tpu_custom_call.1} parent=0 // pred_region
    _
  $region21: #{tpu_custom_call.1} parent=0 // pred_fallthru
    _
  // Predicated region
  $region22: #{tpu_custom_call.1} parent=0 // pred_check
    _
  $region23: #{tpu_custom_call.1} parent=0 // pred_check_branch
    %376 = sbr.rel (0) target = $region25
  $region24: #{tpu_custom_call.1} parent=0 // pred_region
    _
  $region25: #{tpu_custom_call.1} parent=0 // pred_fallthru
    _

</llo_original>
